<compile_context>
chip_gen: v7x
topology: tpu7x:2x2x1
jax: 0.10.0
libtpu: 0.0.40
codegen_flags: <defaults>
</compile_context>

<pallas_src>
import jax
import jax.numpy as jnp
from jax import lax
from jax.experimental import pallas as pl
from jax.experimental.pallas import tpu as pltpu


def gemm_bias_relu_kernel(x_ref, w_ref, b_ref, o_ref):
    # x_ref: (tm, K), w_ref: (tn, K)  ->  contract K of both (transposed RHS).
    acc = lax.dot_general(
        x_ref[...],
        w_ref[...],
        dimension_numbers=(((1,), (1,)), ((), ())),
        preferred_element_type=jnp.float32,
    )
    out = acc + b_ref[...]  # (tm, tn) + (1, tn); bias already f32
    o_ref[...] = jnp.maximum(out, 0.0).astype(o_ref.dtype)


def gemm_add_relu(x, weight, bias, *, tm=128, tn=128):
    """y = relu(x @ weight.T + bias)

    x:      (M, K) float32
    weight: (N, K) float32  (native PyTorch nn.Linear layout; NOT transposed)
    bias:   (N,)   float32
    """
    M, K = x.shape
    N, Kw = weight.shape
    assert K == Kw, "in_features mismatch"

    tm = min(tm, M)
    tn = min(tn, N)
    assert M % tm == 0 and N % tn == 0, "shapes must tile evenly"

    b2d = bias.reshape(1, N)
    grid = (M // tm, N // tn)  # full K in a single block -> no reduction axis

    cost = pl.CostEstimate(
        flops=2 * M * N * K,
        bytes_accessed=(M * K + N * K + M * N + N) * 4,
        transcendentals=0,
    )

    return pl.pallas_call(
        gemm_bias_relu_kernel,
        out_shape=jax.ShapeDtypeStruct((M, N), x.dtype),
        grid_spec=pltpu.PrefetchScalarGridSpec(
            num_scalar_prefetch=0,
            grid=grid,
            in_specs=[
                pl.BlockSpec((tm, K), lambda i, j: (i, 0)),   # x tile
                pl.BlockSpec((tn, K), lambda i, j: (j, 0)),   # weight tile, native (N, K)
                pl.BlockSpec((1, tn), lambda i, j: (0, j)),   # bias tile
            ],
            out_specs=pl.BlockSpec((tm, tn), lambda i, j: (i, j)),
        ),
        compiler_params=pltpu.CompilerParams(
            dimension_semantics=("parallel", "parallel")
        ),
        cost_estimate=cost,
    )(x, weight, b2d)


if __name__ == "__main__":
    in_features = 1024
    out_features = 512
    batch = 128

    key = jax.random.PRNGKey(0)
    kx, kw, kb = jax.random.split(key, 3)

    x = jax.random.normal(kx, (batch, in_features), dtype=jnp.float32)
    # nn.Linear weight: (out_features, in_features); bias param: (out_features,)
    weight = jax.random.normal(kw, (out_features, in_features), dtype=jnp.float32) * 0.02
    bias = jax.random.normal(kb, (out_features,), dtype=jnp.float32)

    y = gemm_add_relu(x, weight, bias)
    y = jax.block_until_ready(y)

    # correctness check against plain-JAX reference
    y_ref = jnp.maximum(x @ weight.T + bias, 0.0)
    assert y.shape == (batch, out_features)
    assert jnp.allclose(y, y_ref, atol=1e-4, rtol=1e-4)

    print("KERNEL_OK")
</pallas_src>

<mosaic_0001>
module attributes {stable_mosaic.version = 11 : i64} {
  func.func @gemm_bias_relu_kernel(%arg0: i32, %arg1: i32, %arg2: memref<128x1024xf32, #tpu.memory_space<vmem>>, %arg3: memref<128x1024xf32, #tpu.memory_space<vmem>>, %arg4: memref<1x128xf32, #tpu.memory_space<vmem>>, %arg5: memref<128x128xf32, #tpu.memory_space<vmem>>) attributes {dimension_semantics = [#tpu.dimension_semantics<parallel>, #tpu.dimension_semantics<parallel>], iteration_bounds = array<i64: 1, 4>, scalar_prefetch = 0 : i64, scratch_operands = 0 : i64, tpu.core_type = #tpu.core_type<tc>, window_params = [{transform_indices = @transform_0, window_bounds = array<i64: 128, 1024>}, {transform_indices = @transform_1, window_bounds = array<i64: 128, 1024>}, {transform_indices = @transform_2, window_bounds = array<i64: 1, 128>}, {transform_indices = @transform_3, window_bounds = array<i64: 128, 128>}]} {
    %c0 = arith.constant 0 : index
    %c0_0 = arith.constant 0 : index
    %0 = vector.load %arg2[%c0, %c0_0] : memref<128x1024xf32, #tpu.memory_space<vmem>>, vector<128x1024xf32>
    %c0_1 = arith.constant 0 : index
    %c0_2 = arith.constant 0 : index
    %1 = vector.load %arg3[%c0_1, %c0_2] : memref<128x1024xf32, #tpu.memory_space<vmem>>, vector<128x1024xf32>
    %cst = arith.constant dense<0.000000e+00> : vector<128x128xf32>
    %2 = tpu.matmul %0, %1, %cst {dimension_numbers = #tpu.dot_dimension_numbers<[1], [1], [0], [0], [0, 0, 1, 0], [], []>} : vector<128x1024xf32>, vector<128x1024xf32>, vector<128x128xf32> -> vector<128x128xf32>
    %c0_3 = arith.constant 0 : index
    %c0_4 = arith.constant 0 : index
    %3 = vector.load %arg4[%c0_3, %c0_4] : memref<1x128xf32, #tpu.memory_space<vmem>>, vector<1x128xf32>
    %4 = vector.broadcast %3 : vector<1x128xf32> to vector<128x128xf32>
    %5 = arith.addf %2, %4 : vector<128x128xf32>
    %cst_5 = arith.constant 0.000000e+00 : f32
    %6 = vector.broadcast %cst_5 : f32 to vector<128x128xf32>
    %7 = arith.maximumf %5, %6 : vector<128x128xf32>
    %c0_6 = arith.constant 0 : index
    %c0_7 = arith.constant 0 : index
    %8 = vector.load %arg5[%c0_6, %c0_7] : memref<128x128xf32, #tpu.memory_space<vmem>>, vector<128x128xf32>
    tpu.vector_store %arg5[%c0_6, %c0_7], %7 {strides = array<i32>} : memref<128x128xf32, #tpu.memory_space<vmem>>, vector<128x128xf32>,
    return
  }
  func.func @transform_0(%arg0: i32, %arg1: i32) -> (i32, i32) {
    %c0_i32 = arith.constant 0 : i32
    %c0_i32_0 = arith.constant 0 : i32
    return %arg0, %c0_i32 : i32, i32
  }
  func.func @transform_1(%arg0: i32, %arg1: i32) -> (i32, i32) {
    %c0_i32 = arith.constant 0 : i32
    %c0_i32_0 = arith.constant 0 : i32
    return %arg1, %c0_i32 : i32, i32
  }
  func.func @transform_2(%arg0: i32, %arg1: i32) -> (i32, i32) {
    %c0_i32 = arith.constant 0 : i32
    %c0_i32_0 = arith.constant 0 : i32
    return %c0_i32, %arg1 : i32, i32
  }
  func.func @transform_3(%arg0: i32, %arg1: i32) -> (i32, i32) {
    %c0_i32 = arith.constant 0 : i32
    return %arg0, %arg1 : i32, i32
  }
}

</mosaic_0001>

<llo_original>
// kernel: tpu_custom_call.1
$region0: #{tpu_custom_call.1}
  #allocation0 [shape = 'u32[]', space=smem, size = 0x4, offset = 0x4, fixed_abs, tag = 'smem constant byte address 0x4 - core index']
  #allocation1 [shape = 'u32[144,128]{1,0:T(1,128)}', space=vmem, size = 0x12000, scoped, tag = 'internal scratch']
  %s0 = inlined_call_operand.hbm [shape: f32[128,1024], index: 0, kind: input, shape index: {}]
  %s1 = inlined_call_operand.hbm [shape: f32[512,1024], index: 1, kind: input, shape index: {}]
  %s2 = inlined_call_operand.hbm [shape: f32[1,512], index: 2, kind: input, shape index: {}]
  %s3 = inlined_call_operand.hbm [shape: f32[128,512], index: 3, kind: output, shape index: {}]
  %s4 = sld [smem:[#allocation0]]
  $region57: #{tpu_custom_call.1} parent=0
    _
  %s6 = ssub.s32 1, %s4
  %s7 = scalar_select 0, %s6, %s4
  $region1: #{tpu_custom_call.1} parent=0
    #allocation2 [shape = 'u8[524288]{0}', space=vmem, size = 0x80000, scoped, tag = 'input window, operand 0, single buffered']
    #allocation3 [shape = 's32[2]{0}', space=sflag, size = 0x8, scoped, tag = 'scoped memory for tpu_custom_call.1']
    #allocation4 [shape = 's32[2]{0}', space=sflag, size = 0x8, scoped, tag = 'scoped memory for tpu_custom_call.1']
    #allocation5 [shape = 'u8[1048576]{0}', space=vmem, size = 0x100000, scoped, tag = 'input window, operand 1']
    #allocation6 [shape = 's32[2]{0}', space=sflag, size = 0x8, scoped, tag = 'scoped memory for tpu_custom_call.1']
    #allocation7 [shape = 'u8[1024]{0}', space=vmem, size = 0x400, scoped, tag = 'input window, operand 2']
    #allocation8 [shape = 'u8[131072]{0}', space=vmem, size = 0x20000, scoped, tag = 'output window, operand 0']
    %8 = vsyncpa [#allocation3], 0
    %9 = vsyncpa [#allocation6], 0
    %s10 = scalar_lea.sflag [#allocation6], 1
    %11 = vsyncpa %s10, 0
    %12 = vsyncpa [#allocation4], 0
    %s13 = scalar_lea.sflag [#allocation4], 1
    %14 = vsyncpa %s13, 0
    loop: start=0, step=1, limit=6
    $region2: #{tpu_custom_call.1} parent=1 // loop_pre_header
      _
    $region3: #{tpu_custom_call.1} parent=1 // loop_header
      %s16 = sphi 0, %s20
      %p17 = scmp.ge.s32.totalorder %s16, 6
      %s23 = sphi 0, %s35
      %s24 = sphi 0, %s31
      %s25 = sphi 0, %s23
      %s26 = sphi 0, %s24
      %s27 = sphi 0, %s25
      %s28 = sphi 0, %s26
      %s38 = sphi 0, %s40
      %s41 = sphi 0, %s38
      %s42 = sphi 0, %s41
      %s58 = sphi 0, %s42
      %s64 = sphi 0, %s66
      %s67 = sphi 0, %s64
      %s68 = sphi 0, %s67
      %s84 = sphi 0, %s68
      %s90 = sphi 0, %s92
      %s93 = sphi 0, %s90
      %s94 = sphi 0, %s93
      %s110 = sphi 0, %s94
      %s118 = sphi 0, %s120
      %s121 = sphi 0, %s118
      %s122 = sphi 0, %s121
      %s138 = sphi 0, %s122
    $region4: #{tpu_custom_call.1} parent=1 // loop_header_branch
      %19 = sbr.rel (%p17) target = $region8
    $region5: #{tpu_custom_call.1} parent=1 // loop_body
      %s21 = ssub.s32 %s16, 1
      %s22 = ssub.s32 %s16, 2
      %s29 = sadd.s32 1, %s24
      %p30 = scmp.ge.s32.totalorder %s29, 4
      %s31 = scalar_select %p30, 0, %s29
      %s32 = sadd.s32 1, %s23
      %s33 = scalar_select %p30, %s32, %s23
      %p34 = scmp.ge.s32.totalorder %s33, 1
      %s35 = scalar_select %p34, 0, %s33
      %s36 = ssub.s32 %s23, %s35
      %p37 = scmp.eq.s32.totalorder %s36, 0
      %s39 = sadd.s32 %s38, 1
      %s40 = scalar_select %p37, %s38, %s39
      %p43 = pneg %p37
      %p44 = scmp.eq.s32.totalorder %s16, 3
      %p45 = por %p43, %p44
      %p46 = scmp.ne.s32.totalorder %s38, %s41
      %p47 = scmp.eq.s32.totalorder %s16, 0
      %p48 = por %p46, %p47
      %p49 = scmp.ne.s32.totalorder %s38, %s41
      %p50 = scmp.eq.s32.totalorder %s21, 3
      %p51 = por %p49, %p50
      %p52 = scmp.ne.s32.totalorder %s41, %s42
      %p53 = scmp.eq.s32.totalorder %s21, 0
      %p54 = por %p52, %p53
      %p55 = scmp.ne.s32.totalorder %s41, %s42
      %p56 = scmp.eq.s32.totalorder %s22, 3
      %p57 = por %p55, %p56
      %p59 = scmp.ne.s32.totalorder %s42, %s58
      %p60 = scmp.eq.s32.totalorder %s22, 0
      %p61 = por %p59, %p60
      %s62 = ssub.s32 %s24, %s31
      %p63 = scmp.eq.s32.totalorder %s62, 0
      %s65 = sadd.s32 %s64, 1
      %s66 = scalar_select %p63, %s64, %s65
      %p69 = pneg %p63
      %p70 = scmp.eq.s32.totalorder %s16, 3
      %p71 = por %p69, %p70
      %p72 = scmp.ne.s32.totalorder %s64, %s67
      %p73 = scmp.eq.s32.totalorder %s16, 0
      %p74 = por %p72, %p73
      %p75 = scmp.ne.s32.totalorder %s64, %s67
      %p76 = scmp.eq.s32.totalorder %s21, 3
      %p77 = por %p75, %p76
      %p78 = scmp.ne.s32.totalorder %s67, %s68
      %p79 = scmp.eq.s32.totalorder %s21, 0
      %p80 = por %p78, %p79
      %p81 = scmp.ne.s32.totalorder %s67, %s68
      %p82 = scmp.eq.s32.totalorder %s22, 3
      %p83 = por %p81, %p82
      %p85 = scmp.ne.s32.totalorder %s68, %s84
      %p86 = scmp.eq.s32.totalorder %s22, 0
      %p87 = por %p85, %p86
      %s88 = ssub.s32 %s24, %s31
      %p89 = scmp.eq.s32.totalorder %s88, 0
      %s91 = sadd.s32 %s90, 1
      %s92 = scalar_select %p89, %s90, %s91
      %p95 = pneg %p89
      %p96 = scmp.eq.s32.totalorder %s16, 3
      %p97 = por %p95, %p96
      %p98 = scmp.ne.s32.totalorder %s90, %s93
      %p99 = scmp.eq.s32.totalorder %s16, 0
      %p100 = por %p98, %p99
      %p101 = scmp.ne.s32.totalorder %s90, %s93
      %p102 = scmp.eq.s32.totalorder %s21, 3
      %p103 = por %p101, %p102
      %p104 = scmp.ne.s32.totalorder %s93, %s94
      %p105 = scmp.eq.s32.totalorder %s21, 0
      %p106 = por %p104, %p105
      %p107 = scmp.ne.s32.totalorder %s93, %s94
      %p108 = scmp.eq.s32.totalorder %s22, 3
      %p109 = por %p107, %p108
      %p111 = scmp.ne.s32.totalorder %s94, %s110
      %p112 = scmp.eq.s32.totalorder %s22, 0
      %p113 = por %p111, %p112
      %s114 = ssub.s32 %s23, %s35
      %s115 = ssub.s32 %s24, %s31
      %s116 = sor.u32 %s114, %s115
      %p117 = scmp.eq.s32.totalorder %s116, 0
      %s119 = sadd.s32 %s118, 1
      %s120 = scalar_select %p117, %s118, %s119
      %p123 = pneg %p117
      %p124 = scmp.eq.s32.totalorder %s16, 3
      %p125 = por %p123, %p124
      %p126 = scmp.ne.s32.totalorder %s118, %s121
      %p127 = scmp.eq.s32.totalorder %s16, 0
      %p128 = por %p126, %p127
      %p129 = scmp.ne.s32.totalorder %s118, %s121
      %p130 = scmp.eq.s32.totalorder %s21, 3
      %p131 = por %p129, %p130
      %p132 = scmp.ne.s32.totalorder %s121, %s122
      %p133 = scmp.eq.s32.totalorder %s21, 0
      %p134 = por %p132, %p133
      %p135 = scmp.ne.s32.totalorder %s121, %s122
      %p136 = scmp.eq.s32.totalorder %s22, 3
      %p137 = por %p135, %p136
      %p139 = scmp.ne.s32.totalorder %s122, %s138
      %p140 = scmp.eq.s32.totalorder %s22, 0
      %p141 = por %p139, %p140
      %p142 = scmp.le.s32.totalorder 1, %s16
      %p143 = scmp.lt.s32.totalorder %s16, 5
      %p144 = pnand %p142, %p143
      %p145 = pneg %p144
      // Predicated region
      $region9: #{tpu_custom_call.1} parent=5 // pred_check
        _
      $region10: #{tpu_custom_call.1} parent=5 // pred_check_branch
        %147 = sbr.rel (%p144) target = $region12
      $region11: #{tpu_custom_call.1} parent=5 // pred_region
        %s148 = ssub.s32 %s16, 1
        // Predicated region
        $region13: #{tpu_custom_call.1} parent=11 // pred_check
          %p149 = pneg %p54
        $region14: #{tpu_custom_call.1} parent=11 // pred_check_branch
          %151 = sbr.rel (%p149) target = $region16
        $region15: #{tpu_custom_call.1} parent=11 // pred_region
          %s152 = smul.u32 16, %s25
          %s154 = ssub.s32 16384, 16384
          %155 = vsyncadd [#allocation3], %s154
          %s156 = smul.addr %s152, 8
          %s157 = smul.addr %s156, 128
          %s158 = scalar_lea.hbm %s0, %s157
          %s159 = sshll.u32 [#allocation2], 4
          %s160 = int_to_ptr.vmem [resolvable:$true] %s159
          %165 = dma.hbm_to_vmem [thread:$0]  %s158, 16384, %s160, [#allocation3], 1024, 1024, 64
        $region16: #{tpu_custom_call.1} parent=11 // pred_fallthru
          _
      $region12: #{tpu_custom_call.1} parent=5 // pred_fallthru
        _
      %p166 = scmp.lt.s32.totalorder %s16, 4
      // Predicated region
      $region17: #{tpu_custom_call.1} parent=5 // pred_check
        %p167 = pneg %p166
      $region18: #{tpu_custom_call.1} parent=5 // pred_check_branch
        %169 = sbr.rel (%p167) target = $region20
      $region19: #{tpu_custom_call.1} parent=5 // pred_region
        // Predicated region
        $region21: #{tpu_custom_call.1} parent=19 // pred_check
          %p170 = pneg %p74
        $region22: #{tpu_custom_call.1} parent=19 // pred_check_branch
          %172 = sbr.rel (%p170) target = $region24
        $region23: #{tpu_custom_call.1} parent=19 // pred_region
          %s173 = sand.u32 %s16, 1
          %s174 = scalar_lea.sflag [#allocation6], %s173
          %s175 = sand.u32 %s64, 1
          %s176 = smul.addr %s175, 1024
          %s177 = scalar_lea.vmem [#allocation5], %s176
          %s178 = smul.u32 16, %s24
          %s180 = ssub.s32 16384, 16384
          %181 = vsyncadd %s174, %s180
          %s182 = smul.addr %s178, 8
          %s183 = smul.addr %s182, 128
          %s184 = scalar_lea.hbm %s1, %s183
          %s185 = sshll.u32 %s177, 4
          %s186 = int_to_ptr.vmem [resolvable:$true] %s185
          %191 = dma.hbm_to_vmem [thread:$0]  %s184, 16384, %s186, %s174, 1024, 1024, 64
        $region24: #{tpu_custom_call.1} parent=19 // pred_fallthru
          _
        // Predicated region
        $region25: #{tpu_custom_call.1} parent=19 // pred_check
          %p192 = pneg %p100
        $region26: #{tpu_custom_call.1} parent=19 // pred_check_branch
          %194 = sbr.rel (%p192) target = $region28
        $region27: #{tpu_custom_call.1} parent=19 // pred_region
          %s195 = sand.u32 %s16, 1
          %s196 = scalar_lea.sflag [#allocation6], %s195
          %s197 = sand.u32 %s90, 1
          %s198 = scalar_lea.vmem [#allocation7], %s197
          %s200 = ssub.s32 16, 16
          %201 = vsyncadd %s196, %s200
          %s202 = smul.addr %s24, 16
          %s203 = scalar_lea.hbm %s2, %s202
          %s205 = sshll.u32 %s198, 4
          %s206 = int_to_ptr.vmem [resolvable:$true] %s205
          %208 = dma.hbm_to_vmem [thread:$0]  %s203, 16, %s206, %s196
        $region28: #{tpu_custom_call.1} parent=19 // pred_fallthru
          _
      $region20: #{tpu_custom_call.1} parent=5 // pred_fallthru
        _
      %p209 = scmp.le.s32.totalorder 1, %s16
      %p210 = scmp.lt.s32.totalorder %s16, 5
      %p211 = pnand %p209, %p210
      %p212 = pneg %p211
      // Predicated region
      $region29: #{tpu_custom_call.1} parent=5 // pred_check
        _
      $region30: #{tpu_custom_call.1} parent=5 // pred_check_branch
        %214 = sbr.rel (%p211) target = $region32
      $region31: #{tpu_custom_call.1} parent=5 // pred_region
        %s215 = ssub.s32 %s16, 1
        // Predicated region
        $region33: #{tpu_custom_call.1} parent=31 // pred_check
          %p216 = pneg %p54
        $region34: #{tpu_custom_call.1} parent=31 // pred_check_branch
          %218 = sbr.rel (%p216) target = $region36
        $region35: #{tpu_custom_call.1} parent=31 // pred_region
          %219 = dma.done [#allocation3], 16384
        $region36: #{tpu_custom_call.1} parent=31 // pred_fallthru
          _
        %s220 = sand.u32 %s21, 1
        %s221 = scalar_lea.sflag [#allocation6], %s220
        %s222 = sand.u32 %s67, 1
        %s223 = smul.addr %s222, 1024
        %s224 = scalar_lea.vmem [#allocation5], %s223
        // Predicated region
        $region37: #{tpu_custom_call.1} parent=31 // pred_check
          %p225 = pneg %p80
        $region38: #{tpu_custom_call.1} parent=31 // pred_check_branch
          %227 = sbr.rel (%p225) target = $region40
        $region39: #{tpu_custom_call.1} parent=31 // pred_region
          %228 = dma.done %s221, 16384
        $region40: #{tpu_custom_call.1} parent=31 // pred_fallthru
          _
        %s229 = sand.u32 %s21, 1
        %s230 = scalar_lea.sflag [#allocation6], %s229
        %s231 = sand.u32 %s93, 1
        %s232 = scalar_lea.vmem [#allocation7], %s231
        // Predicated region
        $region41: #{tpu_custom_call.1} parent=31 // pred_check
          %p233 = pneg %p106
        $region42: #{tpu_custom_call.1} parent=31 // pred_check_branch
          %235 = sbr.rel (%p233) target = $region44
        $region43: #{tpu_custom_call.1} parent=31 // pred_region
          %236 = dma.done %s230, 16
        $region44: #{tpu_custom_call.1} parent=31 // pred_fallthru
          _
        %p237 = pneg %p54
        %p238 = pneg %p51
        %s239 = sand.u32 %s21, 1
        %s240 = scalar_lea.sflag [#allocation6], %s239
        %s241 = sand.u32 %s67, 1
        %s242 = smul.addr %s241, 1024
        %s243 = scalar_lea.vmem [#allocation5], %s242
        %p244 = pneg %p80
        %p245 = pneg %p77
        %s246 = sand.u32 %s21, 1
        %s247 = scalar_lea.sflag [#allocation6], %s246
        %s248 = sand.u32 %s93, 1
        %s249 = scalar_lea.vmem [#allocation7], %s248
        %p250 = pneg %p106
        %p251 = pneg %p103
        %p252 = pneg %p134
        %p253 = pneg %p131
        %s254 = sand.u32 %s121, 1
        %s255 = scalar_lea.sflag [#allocation4], %s254
        %s256 = sand.u32 %s121, 1
        %s257 = smul.addr %s256, 128
        %s258 = scalar_lea.vmem [#allocation8], %s257
        %s259 = smul.u32 16, %s25
        %s260 = smul.u32 16, %s26
        %s261 = smul.u32 16, %s25
        %v262 = vld [vmem:[#allocation2] sm:$0xff]
        %v263 = vld [vmem:[#allocation2 + $0x8] sm:$0xff]
        %v264 = vld [vmem:[#allocation2 + $0x10] sm:$0xff]
        %v265 = vld [vmem:[#allocation2 + $0x18] sm:$0xff]
        %v266 = vld [vmem:[#allocation2 + $0x20] sm:$0xff]
        %v267 = vld [vmem:[#allocation2 + $0x28] sm:$0xff]
        %v268 = vld [vmem:[#allocation2 + $0x30] sm:$0xff]
        %v269 = vld [vmem:[#allocation2 + $0x38] sm:$0xff]
        %v270 = vld [vmem:[#allocation2 + $0x40] sm:$0xff]
        %v271 = vld [vmem:[#allocation2 + $0x48] sm:$0xff]
        %v272 = vld [vmem:[#allocation2 + $0x50] sm:$0xff]
        %v273 = vld [vmem:[#allocation2 + $0x58] sm:$0xff]
        %v274 = vld [vmem:[#allocation2 + $0x60] sm:$0xff]
        %v275 = vld [vmem:[#allocation2 + $0x68] sm:$0xff]
        %v276 = vld [vmem:[#allocation2 + $0x70] sm:$0xff]
        %v277 = vld [vmem:[#allocation2 + $0x78] sm:$0xff]
        %v278 = vld [vmem:[#allocation2 + $0x80] sm:$0xff]
        %v279 = vld [vmem:[#allocation2 + $0x88] sm:$0xff]
        %v280 = vld [vmem:[#allocation2 + $0x90] sm:$0xff]
        %v281 = vld [vmem:[#allocation2 + $0x98] sm:$0xff]
        %v282 = vld [vmem:[#allocation2 + $0xa0] sm:$0xff]
        %v283 = vld [vmem:[#allocation2 + $0xa8] sm:$0xff]
        %v284 = vld [vmem:[#allocation2 + $0xb0] sm:$0xff]
        %v285 = vld [vmem:[#allocation2 + $0xb8] sm:$0xff]
        %v286 = vld [vmem:[#allocation2 + $0xc0] sm:$0xff]
        %v287 = vld [vmem:[#allocation2 + $0xc8] sm:$0xff]
        %v288 = vld [vmem:[#allocation2 + $0xd0] sm:$0xff]
        %v289 = vld [vmem:[#allocation2 + $0xd8] sm:$0xff]
        %v290 = vld [vmem:[#allocation2 + $0xe0] sm:$0xff]
        %v291 = vld [vmem:[#allocation2 + $0xe8] sm:$0xff]
        %v292 = vld [vmem:[#allocation2 + $0xf0] sm:$0xff]
        %v293 = vld [vmem:[#allocation2 + $0xf8] sm:$0xff]
        %v294 = vld [vmem:[#allocation2 + $0x100] sm:$0xff]
        %v295 = vld [vmem:[#allocation2 + $0x108] sm:$0xff]
        %v296 = vld [vmem:[#allocation2 + $0x110] sm:$0xff]
        %v297 = vld [vmem:[#allocation2 + $0x118] sm:$0xff]
        %v298 = vld [vmem:[#allocation2 + $0x120] sm:$0xff]
        %v299 = vld [vmem:[#allocation2 + $0x128] sm:$0xff]
        %v300 = vld [vmem:[#allocation2 + $0x130] sm:$0xff]
        %v301 = vld [vmem:[#allocation2 + $0x138] sm:$0xff]
        %v302 = vld [vmem:[#allocation2 + $0x140] sm:$0xff]
        %v303 = vld [vmem:[#allocation2 + $0x148] sm:$0xff]
        %v304 = vld [vmem:[#allocation2 + $0x150] sm:$0xff]
        %v305 = vld [vmem:[#allocation2 + $0x158] sm:$0xff]
        %v306 = vld [vmem:[#allocation2 + $0x160] sm:$0xff]
        %v307 = vld [vmem:[#allocation2 + $0x168] sm:$0xff]
        %v308 = vld [vmem:[#allocation2 + $0x170] sm:$0xff]
        %v309 = vld [vmem:[#allocation2 + $0x178] sm:$0xff]
        %v310 = vld [vmem:[#allocation2 + $0x180] sm:$0xff]
        %v311 = vld [vmem:[#allocation2 + $0x188] sm:$0xff]
        %v312 = vld [vmem:[#allocation2 + $0x190] sm:$0xff]
        %v313 = vld [vmem:[#allocation2 + $0x198] sm:$0xff]
        %v314 = vld [vmem:[#allocation2 + $0x1a0] sm:$0xff]
        %v315 = vld [vmem:[#allocation2 + $0x1a8] sm:$0xff]
        %v316 = vld [vmem:[#allocation2 + $0x1b0] sm:$0xff]
        %v317 = vld [vmem:[#allocation2 + $0x1b8] sm:$0xff]
        %v318 = vld [vmem:[#allocation2 + $0x1c0] sm:$0xff]
        %v319 = vld [vmem:[#allocation2 + $0x1c8] sm:$0xff]
        %v320 = vld [vmem:[#allocation2 + $0x1d0] sm:$0xff]
        %v321 = vld [vmem:[#allocation2 + $0x1d8] sm:$0xff]
        %v322 = vld [vmem:[#allocation2 + $0x1e0] sm:$0xff]
        %v323 = vld [vmem:[#allocation2 + $0x1e8] sm:$0xff]
        %v324 = vld [vmem:[#allocation2 + $0x1f0] sm:$0xff]
        %v325 = vld [vmem:[#allocation2 + $0x1f8] sm:$0xff]
        %v326 = vld [vmem:[#allocation2 + $0x200] sm:$0xff]
        %v327 = vld [vmem:[#allocation2 + $0x208] sm:$0xff]
        %v328 = vld [vmem:[#allocation2 + $0x210] sm:$0xff]
        %v329 = vld [vmem:[#allocation2 + $0x218] sm:$0xff]
        %v330 = vld [vmem:[#allocation2 + $0x220] sm:$0xff]
        %v331 = vld [vmem:[#allocation2 + $0x228] sm:$0xff]
        %v332 = vld [vmem:[#allocation2 + $0x230] sm:$0xff]
        %v333 = vld [vmem:[#allocation2 + $0x238] sm:$0xff]
        %v334 = vld [vmem:[#allocation2 + $0x240] sm:$0xff]
        %v335 = vld [vmem:[#allocation2 + $0x248] sm:$0xff]
        %v336 = vld [vmem:[#allocation2 + $0x250] sm:$0xff]
        %v337 = vld [vmem:[#allocation2 + $0x258] sm:$0xff]
        %v338 = vld [vmem:[#allocation2 + $0x260] sm:$0xff]
        %v339 = vld [vmem:[#allocation2 + $0x268] sm:$0xff]
        %v340 = vld [vmem:[#allocation2 + $0x270] sm:$0xff]
        %v341 = vld [vmem:[#allocation2 + $0x278] sm:$0xff]
        %v342 = vld [vmem:[#allocation2 + $0x280] sm:$0xff]
        %v343 = vld [vmem:[#allocation2 + $0x288] sm:$0xff]
        %v344 = vld [vmem:[#allocation2 + $0x290] sm:$0xff]
        %v345 = vld [vmem:[#allocation2 + $0x298] sm:$0xff]
        %v346 = vld [vmem:[#allocation2 + $0x2a0] sm:$0xff]
        %v347 = vld [vmem:[#allocation2 + $0x2a8] sm:$0xff]
        %v348 = vld [vmem:[#allocation2 + $0x2b0] sm:$0xff]
        %v349 = vld [vmem:[#allocation2 + $0x2b8] sm:$0xff]
        %v350 = vld [vmem:[#allocation2 + $0x2c0] sm:$0xff]
        %v351 = vld [vmem:[#allocation2 + $0x2c8] sm:$0xff]
        %v352 = vld [vmem:[#allocation2 + $0x2d0] sm:$0xff]
        %v353 = vld [vmem:[#allocation2 + $0x2d8] sm:$0xff]
        %v354 = vld [vmem:[#allocation2 + $0x2e0] sm:$0xff]
        %v355 = vld [vmem:[#allocation2 + $0x2e8] sm:$0xff]
        %v356 = vld [vmem:[#allocation2 + $0x2f0] sm:$0xff]
        %v357 = vld [vmem:[#allocation2 + $0x2f8] sm:$0xff]
        %v358 = vld [vmem:[#allocation2 + $0x300] sm:$0xff]
        %v359 = vld [vmem:[#allocation2 + $0x308] sm:$0xff]
        %v360 = vld [vmem:[#allocation2 + $0x310] sm:$0xff]
        %v361 = vld [vmem:[#allocation2 + $0x318] sm:$0xff]
        %v362 = vld [vmem:[#allocation2 + $0x320] sm:$0xff]
        %v363 = vld [vmem:[#allocation2 + $0x328] sm:$0xff]
        %v364 = vld [vmem:[#allocation2 + $0x330] sm:$0xff]
        %v365 = vld [vmem:[#allocation2 + $0x338] sm:$0xff]
        %v366 = vld [vmem:[#allocation2 + $0x340] sm:$0xff]
        %v367 = vld [vmem:[#allocation2 + $0x348] sm:$0xff]
        %v368 = vld [vmem:[#allocation2 + $0x350] sm:$0xff]
        %v369 = vld [vmem:[#allocation2 + $0x358] sm:$0xff]
        %v370 = vld [vmem:[#allocation2 + $0x360] sm:$0xff]
        %v371 = vld [vmem:[#allocation2 + $0x368] sm:$0xff]
        %v372 = vld [vmem:[#allocation2 + $0x370] sm:$0xff]
        %v373 = vld [vmem:[#allocation2 + $0x378] sm:$0xff]
        %v374 = vld [vmem:[#allocation2 + $0x380] sm:$0xff]
        %v375 = vld [vmem:[#allocation2 + $0x388] sm:$0xff]
        %v376 = vld [vmem:[#allocation2 + $0x390] sm:$0xff]
        %v377 = vld [vmem:[#allocation2 + $0x398] sm:$0xff]
        %v378 = vld [vmem:[#allocation2 + $0x3a0] sm:$0xff]
        %v379 = vld [vmem:[#allocation2 + $0x3a8] sm:$0xff]
        %v380 = vld [vmem:[#allocation2 + $0x3b0] sm:$0xff]
        %v381 = vld [vmem:[#allocation2 + $0x3b8] sm:$0xff]
        %v382 = vld [vmem:[#allocation2 + $0x3c0] sm:$0xff]
        %v383 = vld [vmem:[#allocation2 + $0x3c8] sm:$0xff]
        %v384 = vld [vmem:[#allocation2 + $0x3d0] sm:$0xff]
        %v385 = vld [vmem:[#allocation2 + $0x3d8] sm:$0xff]
        %v386 = vld [vmem:[#allocation2 + $0x3e0] sm:$0xff]
        %v387 = vld [vmem:[#allocation2 + $0x3e8] sm:$0xff]
        %v388 = vld [vmem:[#allocation2 + $0x3f0] sm:$0xff]
        %v389 = vld [vmem:[#allocation2 + $0x3f8] sm:$0xff]
        %v390 = vld [vmem:[%s224] sm:$0xff]
        %v391 = vld [vmem:[%s224 + $0x8] sm:$0xff]
        %v392 = vld [vmem:[%s224 + $0x10] sm:$0xff]
        %v393 = vld [vmem:[%s224 + $0x18] sm:$0xff]
        %v394 = vld [vmem:[%s224 + $0x20] sm:$0xff]
        %v395 = vld [vmem:[%s224 + $0x28] sm:$0xff]
        %v396 = vld [vmem:[%s224 + $0x30] sm:$0xff]
        %v397 = vld [vmem:[%s224 + $0x38] sm:$0xff]
        %v398 = vld [vmem:[%s224 + $0x40] sm:$0xff]
        %v399 = vld [vmem:[%s224 + $0x48] sm:$0xff]
        %v400 = vld [vmem:[%s224 + $0x50] sm:$0xff]
        %v401 = vld [vmem:[%s224 + $0x58] sm:$0xff]
        %v402 = vld [vmem:[%s224 + $0x60] sm:$0xff]
        %v403 = vld [vmem:[%s224 + $0x68] sm:$0xff]
        %v404 = vld [vmem:[%s224 + $0x70] sm:$0xff]
        %v405 = vld [vmem:[%s224 + $0x78] sm:$0xff]
        %v406 = vld [vmem:[%s224 + $0x80] sm:$0xff]
        %v407 = vld [vmem:[%s224 + $0x88] sm:$0xff]
        %v408 = vld [vmem:[%s224 + $0x90] sm:$0xff]
        %v409 = vld [vmem:[%s224 + $0x98] sm:$0xff]
        %v410 = vld [vmem:[%s224 + $0xa0] sm:$0xff]
        %v411 = vld [vmem:[%s224 + $0xa8] sm:$0xff]
        %v412 = vld [vmem:[%s224 + $0xb0] sm:$0xff]
        %v413 = vld [vmem:[%s224 + $0xb8] sm:$0xff]
        %v414 = vld [vmem:[%s224 + $0xc0] sm:$0xff]
        %v415 = vld [vmem:[%s224 + $0xc8] sm:$0xff]
        %v416 = vld [vmem:[%s224 + $0xd0] sm:$0xff]
        %v417 = vld [vmem:[%s224 + $0xd8] sm:$0xff]
        %v418 = vld [vmem:[%s224 + $0xe0] sm:$0xff]
        %v419 = vld [vmem:[%s224 + $0xe8] sm:$0xff]
        %v420 = vld [vmem:[%s224 + $0xf0] sm:$0xff]
        %v421 = vld [vmem:[%s224 + $0xf8] sm:$0xff]
        %v422 = vld [vmem:[%s224 + $0x100] sm:$0xff]
        %v423 = vld [vmem:[%s224 + $0x108] sm:$0xff]
        %v424 = vld [vmem:[%s224 + $0x110] sm:$0xff]
        %v425 = vld [vmem:[%s224 + $0x118] sm:$0xff]
        %v426 = vld [vmem:[%s224 + $0x120] sm:$0xff]
        %v427 = vld [vmem:[%s224 + $0x128] sm:$0xff]
        %v428 = vld [vmem:[%s224 + $0x130] sm:$0xff]
        %v429 = vld [vmem:[%s224 + $0x138] sm:$0xff]
        %v430 = vld [vmem:[%s224 + $0x140] sm:$0xff]
        %v431 = vld [vmem:[%s224 + $0x148] sm:$0xff]
        %v432 = vld [vmem:[%s224 + $0x150] sm:$0xff]
        %v433 = vld [vmem:[%s224 + $0x158] sm:$0xff]
        %v434 = vld [vmem:[%s224 + $0x160] sm:$0xff]
        %v435 = vld [vmem:[%s224 + $0x168] sm:$0xff]
        %v436 = vld [vmem:[%s224 + $0x170] sm:$0xff]
        %v437 = vld [vmem:[%s224 + $0x178] sm:$0xff]
        %v438 = vld [vmem:[%s224 + $0x180] sm:$0xff]
        %v439 = vld [vmem:[%s224 + $0x188] sm:$0xff]
        %v440 = vld [vmem:[%s224 + $0x190] sm:$0xff]
        %v441 = vld [vmem:[%s224 + $0x198] sm:$0xff]
        %v442 = vld [vmem:[%s224 + $0x1a0] sm:$0xff]
        %v443 = vld [vmem:[%s224 + $0x1a8] sm:$0xff]
        %v444 = vld [vmem:[%s224 + $0x1b0] sm:$0xff]
        %v445 = vld [vmem:[%s224 + $0x1b8] sm:$0xff]
        %v446 = vld [vmem:[%s224 + $0x1c0] sm:$0xff]
        %v447 = vld [vmem:[%s224 + $0x1c8] sm:$0xff]
        %v448 = vld [vmem:[%s224 + $0x1d0] sm:$0xff]
        %v449 = vld [vmem:[%s224 + $0x1d8] sm:$0xff]
        %v450 = vld [vmem:[%s224 + $0x1e0] sm:$0xff]
        %v451 = vld [vmem:[%s224 + $0x1e8] sm:$0xff]
        %v452 = vld [vmem:[%s224 + $0x1f0] sm:$0xff]
        %v453 = vld [vmem:[%s224 + $0x1f8] sm:$0xff]
        %v454 = vld [vmem:[%s224 + $0x200] sm:$0xff]
        %v455 = vld [vmem:[%s224 + $0x208] sm:$0xff]
        %v456 = vld [vmem:[%s224 + $0x210] sm:$0xff]
        %v457 = vld [vmem:[%s224 + $0x218] sm:$0xff]
        %v458 = vld [vmem:[%s224 + $0x220] sm:$0xff]
        %v459 = vld [vmem:[%s224 + $0x228] sm:$0xff]
        %v460 = vld [vmem:[%s224 + $0x230] sm:$0xff]
        %v461 = vld [vmem:[%s224 + $0x238] sm:$0xff]
        %v462 = vld [vmem:[%s224 + $0x240] sm:$0xff]
        %v463 = vld [vmem:[%s224 + $0x248] sm:$0xff]
        %v464 = vld [vmem:[%s224 + $0x250] sm:$0xff]
        %v465 = vld [vmem:[%s224 + $0x258] sm:$0xff]
        %v466 = vld [vmem:[%s224 + $0x260] sm:$0xff]
        %v467 = vld [vmem:[%s224 + $0x268] sm:$0xff]
        %v468 = vld [vmem:[%s224 + $0x270] sm:$0xff]
        %v469 = vld [vmem:[%s224 + $0x278] sm:$0xff]
        %v470 = vld [vmem:[%s224 + $0x280] sm:$0xff]
        %v471 = vld [vmem:[%s224 + $0x288] sm:$0xff]
        %v472 = vld [vmem:[%s224 + $0x290] sm:$0xff]
        %v473 = vld [vmem:[%s224 + $0x298] sm:$0xff]
        %v474 = vld [vmem:[%s224 + $0x2a0] sm:$0xff]
        %v475 = vld [vmem:[%s224 + $0x2a8] sm:$0xff]
        %v476 = vld [vmem:[%s224 + $0x2b0] sm:$0xff]
        %v477 = vld [vmem:[%s224 + $0x2b8] sm:$0xff]
        %v478 = vld [vmem:[%s224 + $0x2c0] sm:$0xff]
        %v479 = vld [vmem:[%s224 + $0x2c8] sm:$0xff]
        %v480 = vld [vmem:[%s224 + $0x2d0] sm:$0xff]
        %v481 = vld [vmem:[%s224 + $0x2d8] sm:$0xff]
        %v482 = vld [vmem:[%s224 + $0x2e0] sm:$0xff]
        %v483 = vld [vmem:[%s224 + $0x2e8] sm:$0xff]
        %v484 = vld [vmem:[%s224 + $0x2f0] sm:$0xff]
        %v485 = vld [vmem:[%s224 + $0x2f8] sm:$0xff]
        %v486 = vld [vmem:[%s224 + $0x300] sm:$0xff]
        %v487 = vld [vmem:[%s224 + $0x308] sm:$0xff]
        %v488 = vld [vmem:[%s224 + $0x310] sm:$0xff]
        %v489 = vld [vmem:[%s224 + $0x318] sm:$0xff]
        %v490 = vld [vmem:[%s224 + $0x320] sm:$0xff]
        %v491 = vld [vmem:[%s224 + $0x328] sm:$0xff]
        %v492 = vld [vmem:[%s224 + $0x330] sm:$0xff]
        %v493 = vld [vmem:[%s224 + $0x338] sm:$0xff]
        %v494 = vld [vmem:[%s224 + $0x340] sm:$0xff]
        %v495 = vld [vmem:[%s224 + $0x348] sm:$0xff]
        %v496 = vld [vmem:[%s224 + $0x350] sm:$0xff]
        %v497 = vld [vmem:[%s224 + $0x358] sm:$0xff]
        %v498 = vld [vmem:[%s224 + $0x360] sm:$0xff]
        %v499 = vld [vmem:[%s224 + $0x368] sm:$0xff]
        %v500 = vld [vmem:[%s224 + $0x370] sm:$0xff]
        %v501 = vld [vmem:[%s224 + $0x378] sm:$0xff]
        %v502 = vld [vmem:[%s224 + $0x380] sm:$0xff]
        %v503 = vld [vmem:[%s224 + $0x388] sm:$0xff]
        %v504 = vld [vmem:[%s224 + $0x390] sm:$0xff]
        %v505 = vld [vmem:[%s224 + $0x398] sm:$0xff]
        %v506 = vld [vmem:[%s224 + $0x3a0] sm:$0xff]
        %v507 = vld [vmem:[%s224 + $0x3a8] sm:$0xff]
        %v508 = vld [vmem:[%s224 + $0x3b0] sm:$0xff]
        %v509 = vld [vmem:[%s224 + $0x3b8] sm:$0xff]
        %v510 = vld [vmem:[%s224 + $0x3c0] sm:$0xff]
        %v511 = vld [vmem:[%s224 + $0x3c8] sm:$0xff]
        %v512 = vld [vmem:[%s224 + $0x3d0] sm:$0xff]
        %v513 = vld [vmem:[%s224 + $0x3d8] sm:$0xff]
        %v514 = vld [vmem:[%s224 + $0x3e0] sm:$0xff]
        %v515 = vld [vmem:[%s224 + $0x3e8] sm:$0xff]
        %v516 = vld [vmem:[%s224 + $0x3f0] sm:$0xff]
        %v517 = vld [vmem:[%s224 + $0x3f8] sm:$0xff]
        %v518 = vld [vmem:[%s232] sm:$0x1]
        %v520 = vlaneseq
        %v521 = vshrl.u32 %v520, 7
        %v522 = vsub.s32 0, %v521
        %v523 = vrot.slane %v518, %v522
        %525 = vmatprep.subr.mxu0 %v391
        %526 = vmatpush1.xpose.msra.mxu0 %v390
        %527 = vmatprep.subr.mxu0 %v399
        %528 = vmatpush1.xpose.msra.mxu0 %v398
        %529 = vmatprep.subr.mxu0 %v407
        %530 = vmatpush1.xpose.msra.mxu0 %v406
        %531 = vmatprep.subr.mxu0 %v415
        %532 = vmatpush1.xpose.msra.mxu0 %v414
        %533 = vmatprep.subr.mxu0 %v423
        %534 = vmatpush1.xpose.msra.mxu0 %v422
        %535 = vmatprep.subr.mxu0 %v431
        %536 = vmatpush1.xpose.msra.mxu0 %v430
        %537 = vmatprep.subr.mxu0 %v439
        %538 = vmatpush1.xpose.msra.mxu0 %v438
        %539 = vmatprep.subr.mxu0 %v447
        %540 = vmatpush1.xpose.msra.mxu0 %v446
        %541 = vmatprep.subr.mxu0 %v455
        %542 = vmatpush1.xpose.msra.mxu0 %v454
        %543 = vmatprep.subr.mxu0 %v463
        %544 = vmatpush1.xpose.msra.mxu0 %v462
        %545 = vmatprep.subr.mxu0 %v471
        %546 = vmatpush1.xpose.msra.mxu0 %v470
        %547 = vmatprep.subr.mxu0 %v479
        %548 = vmatpush1.xpose.msra.mxu0 %v478
        %549 = vmatprep.subr.mxu0 %v487
        %550 = vmatpush1.xpose.msra.mxu0 %v486
        %551 = vmatprep.subr.mxu0 %v495
        %552 = vmatpush1.xpose.msra.mxu0 %v494
        %553 = vmatprep.subr.mxu0 %v503
        %554 = vmatpush1.xpose.msra.mxu0 %v502
        %555 = vmatprep.subr.mxu0 %v511
        %556 = vmatpush1.xpose.msra.mxu0 %v510
        %557 = vmatprep.subr.mxu0 0.0
        %558 = vmatpush1.xpose.msra.mxu0 0.0
        %559 = vmatprep.subr.mxu0 0.0
        %560 = vmatpush1.xpose.msra.mxu0 0.0
        %561 = vmatprep.subr.mxu0 0.0
        %562 = vmatpush1.xpose.msra.mxu0 0.0
        %563 = vmatprep.subr.mxu0 0.0
        %564 = vmatpush1.xpose.msra.mxu0 0.0
        %565 = vmatprep.subr.mxu0 0.0
        %566 = vmatpush1.xpose.msra.mxu0 0.0
        %567 = vmatprep.subr.mxu0 0.0
        %568 = vmatpush1.xpose.msra.mxu0 0.0
        %569 = vmatprep.subr.mxu0 0.0
        %570 = vmatpush1.xpose.msra.mxu0 0.0
        %571 = vmatprep.subr.mxu0 0.0
        %572 = vmatpush1.xpose.msra.mxu0 0.0
        %573 = vmatprep.subr.mxu0 0.0
        %574 = vmatpush1.xpose.msra.mxu0 0.0
        %575 = vmatprep.subr.mxu0 0.0
        %576 = vmatpush1.xpose.msra.mxu0 0.0
        %577 = vmatprep.subr.mxu0 0.0
        %578 = vmatpush1.xpose.msra.mxu0 0.0
        %579 = vmatprep.subr.mxu0 0.0
        %580 = vmatpush1.xpose.msra.mxu0 0.0
        %581 = vmatprep.subr.mxu0 0.0
        %582 = vmatpush1.xpose.msra.mxu0 0.0
        %583 = vmatprep.subr.mxu0 0.0
        %584 = vmatpush1.xpose.msra.mxu0 0.0
        %585 = vmatprep.subr.mxu0 0.0
        %586 = vmatpush1.xpose.msra.mxu0 0.0
        %587 = vmatprep.subr.mxu0 0.0
        %588 = vmatpush1.xpose.msra.mxu0 0.0
        %589 = vmatprep.mubr.f32.mxu0 %v263
        %590 = vmatmul.mubr.f32.gmra.mrb[0].mxu0 %v262
        %v591 = vpop.f32.mrb[0].mxu0
        %v592 = vadd.f32 %v523, %v591
        %v593 = vpop.f32.mrb[0].mxu0
        %594 = vmatprep.mubr.f32.mxu0 %v271
        %595 = vmatmul.mubr.f32.gmra.mrb[0].mxu0 %v270
        %v596 = vpop.f32.mrb[0].mxu0
        %v597 = vadd.f32 %v523, %v596
        %v598 = vpop.f32.mrb[0].mxu0
        %599 = vmatprep.mubr.f32.mxu0 %v279
        %600 = vmatmul.mubr.f32.gmra.mrb[0].mxu0 %v278
        %v601 = vpop.f32.mrb[0].mxu0
        %v602 = vadd.f32 %v523, %v601
        %v603 = vpop.f32.mrb[0].mxu0
        %604 = vmatprep.mubr.f32.mxu0 %v287
        %605 = vmatmul.mubr.f32.gmra.mrb[0].mxu0 %v286
        %v606 = vpop.f32.mrb[0].mxu0
        %v607 = vadd.f32 %v523, %v606
        %v608 = vpop.f32.mrb[0].mxu0
        %609 = vmatprep.mubr.f32.mxu0 %v295
        %610 = vmatmul.mubr.f32.gmra.mrb[0].mxu0 %v294
        %v611 = vpop.f32.mrb[0].mxu0
        %v612 = vadd.f32 %v523, %v611
        %v613 = vpop.f32.mrb[0].mxu0
        %614 = vmatprep.mubr.f32.mxu0 %v303
        %615 = vmatmul.mubr.f32.gmra.mrb[0].mxu0 %v302
        %v616 = vpop.f32.mrb[0].mxu0
        %v617 = vadd.f32 %v523, %v616
        %v618 = vpop.f32.mrb[0].mxu0
        %619 = vmatprep.mubr.f32.mxu0 %v311
        %620 = vmatmul.mubr.f32.gmra.mrb[0].mxu0 %v310
        %v621 = vpop.f32.mrb[0].mxu0
        %v622 = vadd.f32 %v523, %v621
        %v623 = vpop.f32.mrb[0].mxu0
        %624 = vmatprep.mubr.f32.mxu0 %v319
        %625 = vmatmul.mubr.f32.gmra.mrb[0].mxu0 %v318
        %v626 = vpop.f32.mrb[0].mxu0
        %v627 = vadd.f32 %v523, %v626
        %v628 = vpop.f32.mrb[0].mxu0
        %629 = vmatprep.mubr.f32.mxu0 %v327
        %630 = vmatmul.mubr.f32.gmra.mrb[0].mxu0 %v326
        %v631 = vpop.f32.mrb[0].mxu0
        %v632 = vadd.f32 %v523, %v631
        %v633 = vpop.f32.mrb[0].mxu0
        %634 = vmatprep.mubr.f32.mxu0 %v335
        %635 = vmatmul.mubr.f32.gmra.mrb[0].mxu0 %v334
        %v636 = vpop.f32.mrb[0].mxu0
        %v637 = vadd.f32 %v523, %v636
        %v638 = vpop.f32.mrb[0].mxu0
        %639 = vmatprep.mubr.f32.mxu0 %v343
        %640 = vmatmul.mubr.f32.gmra.mrb[0].mxu0 %v342
        %v641 = vpop.f32.mrb[0].mxu0
        %v642 = vadd.f32 %v523, %v641
        %v643 = vpop.f32.mrb[0].mxu0
        %644 = vmatprep.mubr.f32.mxu0 %v351
        %645 = vmatmul.mubr.f32.gmra.mrb[0].mxu0 %v350
        %v646 = vpop.f32.mrb[0].mxu0
        %v647 = vadd.f32 %v523, %v646
        %v648 = vpop.f32.mrb[0].mxu0
        %649 = vmatprep.mubr.f32.mxu0 %v359
        %650 = vmatmul.mubr.f32.gmra.mrb[0].mxu0 %v358
        %v651 = vpop.f32.mrb[0].mxu0
        %v652 = vadd.f32 %v523, %v651
        %v653 = vpop.f32.mrb[0].mxu0
        %654 = vmatprep.mubr.f32.mxu0 %v367
        %655 = vmatmul.mubr.f32.gmra.mrb[0].mxu0 %v366
        %v656 = vpop.f32.mrb[0].mxu0
        %v657 = vadd.f32 %v523, %v656
        %v658 = vpop.f32.mrb[0].mxu0
        %659 = vmatprep.mubr.f32.mxu0 %v375
        %660 = vmatmul.mubr.f32.gmra.mrb[0].mxu0 %v374
        %v661 = vpop.f32.mrb[0].mxu0
        %v662 = vadd.f32 %v523, %v661
        %v663 = vpop.f32.mrb[0].mxu0
        %664 = vmatprep.mubr.f32.mxu0 %v383
        %665 = vmatmul.mubr.f32.gmra.mrb[0].mxu0 %v382
        %v666 = vpop.f32.mrb[0].mxu0
        %v667 = vadd.f32 %v523, %v666
        %v668 = vpop.f32.mrb[0].mxu0
        %669 = vdwg.mxu0
        %670 = vmatprep.subr.mxu0 %v393
        %671 = vmatpush1.xpose.msra.mxu0 %v392
        %672 = vmatprep.subr.mxu0 %v401
        %673 = vmatpush1.xpose.msra.mxu0 %v400
        %674 = vmatprep.subr.mxu0 %v409
        %675 = vmatpush1.xpose.msra.mxu0 %v408
        %676 = vmatprep.subr.mxu0 %v417
        %677 = vmatpush1.xpose.msra.mxu0 %v416
        %678 = vmatprep.subr.mxu0 %v425
        %679 = vmatpush1.xpose.msra.mxu0 %v424
        %680 = vmatprep.subr.mxu0 %v433
        %681 = vmatpush1.xpose.msra.mxu0 %v432
        %682 = vmatprep.subr.mxu0 %v441
        %683 = vmatpush1.xpose.msra.mxu0 %v440
        %684 = vmatprep.subr.mxu0 %v449
        %685 = vmatpush1.xpose.msra.mxu0 %v448
        %686 = vmatprep.subr.mxu0 %v457
        %687 = vmatpush1.xpose.msra.mxu0 %v456
        %688 = vmatprep.subr.mxu0 %v465
        %689 = vmatpush1.xpose.msra.mxu0 %v464
        %690 = vmatprep.subr.mxu0 %v473
        %691 = vmatpush1.xpose.msra.mxu0 %v472
        %692 = vmatprep.subr.mxu0 %v481
        %693 = vmatpush1.xpose.msra.mxu0 %v480
        %694 = vmatprep.subr.mxu0 %v489
        %695 = vmatpush1.xpose.msra.mxu0 %v488
        %696 = vmatprep.subr.mxu0 %v497
        %697 = vmatpush1.xpose.msra.mxu0 %v496
        %698 = vmatprep.subr.mxu0 %v505
        %699 = vmatpush1.xpose.msra.mxu0 %v504
        %700 = vmatprep.subr.mxu0 %v513
        %701 = vmatpush1.xpose.msra.mxu0 %v512
        %702 = vmatprep.subr.mxu0 0.0
        %703 = vmatpush1.xpose.msra.mxu0 0.0
        %704 = vmatprep.subr.mxu0 0.0
        %705 = vmatpush1.xpose.msra.mxu0 0.0
        %706 = vmatprep.subr.mxu0 0.0
        %707 = vmatpush1.xpose.msra.mxu0 0.0
        %708 = vmatprep.subr.mxu0 0.0
        %709 = vmatpush1.xpose.msra.mxu0 0.0
        %710 = vmatprep.subr.mxu0 0.0
        %711 = vmatpush1.xpose.msra.mxu0 0.0
        %712 = vmatprep.subr.mxu0 0.0
        %713 = vmatpush1.xpose.msra.mxu0 0.0
        %714 = vmatprep.subr.mxu0 0.0
        %715 = vmatpush1.xpose.msra.mxu0 0.0
        %716 = vmatprep.subr.mxu0 0.0
        %717 = vmatpush1.xpose.msra.mxu0 0.0
        %718 = vmatprep.subr.mxu0 0.0
        %719 = vmatpush1.xpose.msra.mxu0 0.0
        %720 = vmatprep.subr.mxu0 0.0
        %721 = vmatpush1.xpose.msra.mxu0 0.0
        %722 = vmatprep.subr.mxu0 0.0
        %723 = vmatpush1.xpose.msra.mxu0 0.0
        %724 = vmatprep.subr.mxu0 0.0
        %725 = vmatpush1.xpose.msra.mxu0 0.0
        %726 = vmatprep.subr.mxu0 0.0
        %727 = vmatpush1.xpose.msra.mxu0 0.0
        %728 = vmatprep.subr.mxu0 0.0
        %729 = vmatpush1.xpose.msra.mxu0 0.0
        %730 = vmatprep.subr.mxu0 0.0
        %731 = vmatpush1.xpose.msra.mxu0 0.0
        %732 = vmatprep.subr.mxu0 0.0
        %733 = vmatpush1.xpose.msra.mxu0 0.0
        %734 = vmatprep.mubr.f32.mxu0 %v265
        %735 = vmatmul.mubr.f32.gmra.mrb[0].mxu0 %v264
        %v736 = vpop.f32.mrb[0].mxu0
        %v737 = vadd.f32 %v592, %v736
        %v738 = vpop.f32.mrb[0].mxu0
        %739 = vmatprep.mubr.f32.mxu0 %v273
        %740 = vmatmul.mubr.f32.gmra.mrb[0].mxu0 %v272
        %v741 = vpop.f32.mrb[0].mxu0
        %v742 = vadd.f32 %v597, %v741
        %v743 = vpop.f32.mrb[0].mxu0
        %744 = vmatprep.mubr.f32.mxu0 %v281
        %745 = vmatmul.mubr.f32.gmra.mrb[0].mxu0 %v280
        %v746 = vpop.f32.mrb[0].mxu0
        %v747 = vadd.f32 %v602, %v746
        %v748 = vpop.f32.mrb[0].mxu0
        %749 = vmatprep.mubr.f32.mxu0 %v289
        %750 = vmatmul.mubr.f32.gmra.mrb[0].mxu0 %v288
        %v751 = vpop.f32.mrb[0].mxu0
        %v752 = vadd.f32 %v607, %v751
        %v753 = vpop.f32.mrb[0].mxu0
        %754 = vmatprep.mubr.f32.mxu0 %v297
        %755 = vmatmul.mubr.f32.gmra.mrb[0].mxu0 %v296
        %v756 = vpop.f32.mrb[0].mxu0
        %v757 = vadd.f32 %v612, %v756
        %v758 = vpop.f32.mrb[0].mxu0
        %759 = vmatprep.mubr.f32.mxu0 %v305
        %760 = vmatmul.mubr.f32.gmra.mrb[0].mxu0 %v304
        %v761 = vpop.f32.mrb[0].mxu0
        %v762 = vadd.f32 %v617, %v761
        %v763 = vpop.f32.mrb[0].mxu0
        %764 = vmatprep.mubr.f32.mxu0 %v313
        %765 = vmatmul.mubr.f32.gmra.mrb[0].mxu0 %v312
        %v766 = vpop.f32.mrb[0].mxu0
        %v767 = vadd.f32 %v622, %v766
        %v768 = vpop.f32.mrb[0].mxu0
        %769 = vmatprep.mubr.f32.mxu0 %v321
        %770 = vmatmul.mubr.f32.gmra.mrb[0].mxu0 %v320
        %v771 = vpop.f32.mrb[0].mxu0
        %v772 = vadd.f32 %v627, %v771
        %v773 = vpop.f32.mrb[0].mxu0
        %774 = vmatprep.mubr.f32.mxu0 %v329
        %775 = vmatmul.mubr.f32.gmra.mrb[0].mxu0 %v328
        %v776 = vpop.f32.mrb[0].mxu0
        %v777 = vadd.f32 %v632, %v776
        %v778 = vpop.f32.mrb[0].mxu0
        %779 = vmatprep.mubr.f32.mxu0 %v337
        %780 = vmatmul.mubr.f32.gmra.mrb[0].mxu0 %v336
        %v781 = vpop.f32.mrb[0].mxu0
        %v782 = vadd.f32 %v637, %v781
        %v783 = vpop.f32.mrb[0].mxu0
        %784 = vmatprep.mubr.f32.mxu0 %v345
        %785 = vmatmul.mubr.f32.gmra.mrb[0].mxu0 %v344
        %v786 = vpop.f32.mrb[0].mxu0
        %v787 = vadd.f32 %v642, %v786
        %v788 = vpop.f32.mrb[0].mxu0
        %789 = vmatprep.mubr.f32.mxu0 %v353
        %790 = vmatmul.mubr.f32.gmra.mrb[0].mxu0 %v352
        %v791 = vpop.f32.mrb[0].mxu0
        %v792 = vadd.f32 %v647, %v791
        %v793 = vpop.f32.mrb[0].mxu0
        %794 = vmatprep.mubr.f32.mxu0 %v361
        %795 = vmatmul.mubr.f32.gmra.mrb[0].mxu0 %v360
        %v796 = vpop.f32.mrb[0].mxu0
        %v797 = vadd.f32 %v652, %v796
        %v798 = vpop.f32.mrb[0].mxu0
        %799 = vmatprep.mubr.f32.mxu0 %v369
        %800 = vmatmul.mubr.f32.gmra.mrb[0].mxu0 %v368
        %v801 = vpop.f32.mrb[0].mxu0
        %v802 = vadd.f32 %v657, %v801
        %v803 = vpop.f32.mrb[0].mxu0
        %804 = vmatprep.mubr.f32.mxu0 %v377
        %805 = vmatmul.mubr.f32.gmra.mrb[0].mxu0 %v376
        %v806 = vpop.f32.mrb[0].mxu0
        %v807 = vadd.f32 %v662, %v806
        %v808 = vpop.f32.mrb[0].mxu0
        %809 = vmatprep.mubr.f32.mxu0 %v385
        %810 = vmatmul.mubr.f32.gmra.mrb[0].mxu0 %v384
        %v811 = vpop.f32.mrb[0].mxu0
        %v812 = vadd.f32 %v667, %v811
        %v813 = vpop.f32.mrb[0].mxu0
        %814 = vdwg.mxu0
        %815 = vmatprep.subr.mxu0 %v395
        %816 = vmatpush1.xpose.msra.mxu0 %v394
        %817 = vmatprep.subr.mxu0 %v403
        %818 = vmatpush1.xpose.msra.mxu0 %v402
        %819 = vmatprep.subr.mxu0 %v411
        %820 = vmatpush1.xpose.msra.mxu0 %v410
        %821 = vmatprep.subr.mxu0 %v419
        %822 = vmatpush1.xpose.msra.mxu0 %v418
        %823 = vmatprep.subr.mxu0 %v427
        %824 = vmatpush1.xpose.msra.mxu0 %v426
        %825 = vmatprep.subr.mxu0 %v435
        %826 = vmatpush1.xpose.msra.mxu0 %v434
        %827 = vmatprep.subr.mxu0 %v443
        %828 = vmatpush1.xpose.msra.mxu0 %v442
        %829 = vmatprep.subr.mxu0 %v451
        %830 = vmatpush1.xpose.msra.mxu0 %v450
        %831 = vmatprep.subr.mxu0 %v459
        %832 = vmatpush1.xpose.msra.mxu0 %v458
        %833 = vmatprep.subr.mxu0 %v467
        %834 = vmatpush1.xpose.msra.mxu0 %v466
        %835 = vmatprep.subr.mxu0 %v475
        %836 = vmatpush1.xpose.msra.mxu0 %v474
        %837 = vmatprep.subr.mxu0 %v483
        %838 = vmatpush1.xpose.msra.mxu0 %v482
        %839 = vmatprep.subr.mxu0 %v491
        %840 = vmatpush1.xpose.msra.mxu0 %v490
        %841 = vmatprep.subr.mxu0 %v499
        %842 = vmatpush1.xpose.msra.mxu0 %v498
        %843 = vmatprep.subr.mxu0 %v507
        %844 = vmatpush1.xpose.msra.mxu0 %v506
        %845 = vmatprep.subr.mxu0 %v515
        %846 = vmatpush1.xpose.msra.mxu0 %v514
        %847 = vmatprep.subr.mxu0 0.0
        %848 = vmatpush1.xpose.msra.mxu0 0.0
        %849 = vmatprep.subr.mxu0 0.0
        %850 = vmatpush1.xpose.msra.mxu0 0.0
        %851 = vmatprep.subr.mxu0 0.0
        %852 = vmatpush1.xpose.msra.mxu0 0.0
        %853 = vmatprep.subr.mxu0 0.0
        %854 = vmatpush1.xpose.msra.mxu0 0.0
        %855 = vmatprep.subr.mxu0 0.0
        %856 = vmatpush1.xpose.msra.mxu0 0.0
        %857 = vmatprep.subr.mxu0 0.0
        %858 = vmatpush1.xpose.msra.mxu0 0.0
        %859 = vmatprep.subr.mxu0 0.0
        %860 = vmatpush1.xpose.msra.mxu0 0.0
        %861 = vmatprep.subr.mxu0 0.0
        %862 = vmatpush1.xpose.msra.mxu0 0.0
        %863 = vmatprep.subr.mxu0 0.0
        %864 = vmatpush1.xpose.msra.mxu0 0.0
        %865 = vmatprep.subr.mxu0 0.0
        %866 = vmatpush1.xpose.msra.mxu0 0.0
        %867 = vmatprep.subr.mxu0 0.0
        %868 = vmatpush1.xpose.msra.mxu0 0.0
        %869 = vmatprep.subr.mxu0 0.0
        %870 = vmatpush1.xpose.msra.mxu0 0.0
        %871 = vmatprep.subr.mxu0 0.0
        %872 = vmatpush1.xpose.msra.mxu0 0.0
        %873 = vmatprep.subr.mxu0 0.0
        %874 = vmatpush1.xpose.msra.mxu0 0.0
        %875 = vmatprep.subr.mxu0 0.0
        %876 = vmatpush1.xpose.msra.mxu0 0.0
        %877 = vmatprep.subr.mxu0 0.0
        %878 = vmatpush1.xpose.msra.mxu0 0.0
        %879 = vmatprep.mubr.f32.mxu0 %v267
        %880 = vmatmul.mubr.f32.gmra.mrb[0].mxu0 %v266
        %v881 = vpop.f32.mrb[0].mxu0
        %v882 = vadd.f32 %v737, %v881
        %v883 = vpop.f32.mrb[0].mxu0
        %884 = vmatprep.mubr.f32.mxu0 %v275
        %885 = vmatmul.mubr.f32.gmra.mrb[0].mxu0 %v274
        %v886 = vpop.f32.mrb[0].mxu0
        %v887 = vadd.f32 %v742, %v886
        %v888 = vpop.f32.mrb[0].mxu0
        %889 = vmatprep.mubr.f32.mxu0 %v283
        %890 = vmatmul.mubr.f32.gmra.mrb[0].mxu0 %v282
        %v891 = vpop.f32.mrb[0].mxu0
        %v892 = vadd.f32 %v747, %v891
        %v893 = vpop.f32.mrb[0].mxu0
        %894 = vmatprep.mubr.f32.mxu0 %v291
        %895 = vmatmul.mubr.f32.gmra.mrb[0].mxu0 %v290
        %v896 = vpop.f32.mrb[0].mxu0
        %v897 = vadd.f32 %v752, %v896
        %v898 = vpop.f32.mrb[0].mxu0
        %899 = vmatprep.mubr.f32.mxu0 %v299
        %900 = vmatmul.mubr.f32.gmra.mrb[0].mxu0 %v298
        %v901 = vpop.f32.mrb[0].mxu0
        %v902 = vadd.f32 %v757, %v901
        %v903 = vpop.f32.mrb[0].mxu0
        %904 = vmatprep.mubr.f32.mxu0 %v307
        %905 = vmatmul.mubr.f32.gmra.mrb[0].mxu0 %v306
        %v906 = vpop.f32.mrb[0].mxu0
        %v907 = vadd.f32 %v762, %v906
        %v908 = vpop.f32.mrb[0].mxu0
        %909 = vmatprep.mubr.f32.mxu0 %v315
        %910 = vmatmul.mubr.f32.gmra.mrb[0].mxu0 %v314
        %v911 = vpop.f32.mrb[0].mxu0
        %v912 = vadd.f32 %v767, %v911
        %v913 = vpop.f32.mrb[0].mxu0
        %914 = vmatprep.mubr.f32.mxu0 %v323
        %915 = vmatmul.mubr.f32.gmra.mrb[0].mxu0 %v322
        %v916 = vpop.f32.mrb[0].mxu0
        %v917 = vadd.f32 %v772, %v916
        %v918 = vpop.f32.mrb[0].mxu0
        %919 = vmatprep.mubr.f32.mxu0 %v331
        %920 = vmatmul.mubr.f32.gmra.mrb[0].mxu0 %v330
        %v921 = vpop.f32.mrb[0].mxu0
        %v922 = vadd.f32 %v777, %v921
        %v923 = vpop.f32.mrb[0].mxu0
        %924 = vmatprep.mubr.f32.mxu0 %v339
        %925 = vmatmul.mubr.f32.gmra.mrb[0].mxu0 %v338
        %v926 = vpop.f32.mrb[0].mxu0
        %v927 = vadd.f32 %v782, %v926
        %v928 = vpop.f32.mrb[0].mxu0
        %929 = vmatprep.mubr.f32.mxu0 %v347
        %930 = vmatmul.mubr.f32.gmra.mrb[0].mxu0 %v346
        %v931 = vpop.f32.mrb[0].mxu0
        %v932 = vadd.f32 %v787, %v931
        %v933 = vpop.f32.mrb[0].mxu0
        %934 = vmatprep.mubr.f32.mxu0 %v355
        %935 = vmatmul.mubr.f32.gmra.mrb[0].mxu0 %v354
        %v936 = vpop.f32.mrb[0].mxu0
        %v937 = vadd.f32 %v792, %v936
        %v938 = vpop.f32.mrb[0].mxu0
        %939 = vmatprep.mubr.f32.mxu0 %v363
        %940 = vmatmul.mubr.f32.gmra.mrb[0].mxu0 %v362
        %v941 = vpop.f32.mrb[0].mxu0
        %v942 = vadd.f32 %v797, %v941
        %v943 = vpop.f32.mrb[0].mxu0
        %944 = vmatprep.mubr.f32.mxu0 %v371
        %945 = vmatmul.mubr.f32.gmra.mrb[0].mxu0 %v370
        %v946 = vpop.f32.mrb[0].mxu0
        %v947 = vadd.f32 %v802, %v946
        %v948 = vpop.f32.mrb[0].mxu0
        %949 = vmatprep.mubr.f32.mxu0 %v379
        %950 = vmatmul.mubr.f32.gmra.mrb[0].mxu0 %v378
        %v951 = vpop.f32.mrb[0].mxu0
        %v952 = vadd.f32 %v807, %v951
        %v953 = vpop.f32.mrb[0].mxu0
        %954 = vmatprep.mubr.f32.mxu0 %v387
        %955 = vmatmul.mubr.f32.gmra.mrb[0].mxu0 %v386
        %v956 = vpop.f32.mrb[0].mxu0
        %v957 = vadd.f32 %v812, %v956
        %v958 = vpop.f32.mrb[0].mxu0
        %959 = vdwg.mxu0
        %960 = vmatprep.subr.mxu0 %v397
        %961 = vmatpush1.xpose.msra.mxu0 %v396
        %962 = vmatprep.subr.mxu0 %v405
        %963 = vmatpush1.xpose.msra.mxu0 %v404
        %964 = vmatprep.subr.mxu0 %v413
        %965 = vmatpush1.xpose.msra.mxu0 %v412
        %966 = vmatprep.subr.mxu0 %v421
        %967 = vmatpush1.xpose.msra.mxu0 %v420
        %968 = vmatprep.subr.mxu0 %v429
        %969 = vmatpush1.xpose.msra.mxu0 %v428
        %970 = vmatprep.subr.mxu0 %v437
        %971 = vmatpush1.xpose.msra.mxu0 %v436
        %972 = vmatprep.subr.mxu0 %v445
        %973 = vmatpush1.xpose.msra.mxu0 %v444
        %974 = vmatprep.subr.mxu0 %v453
        %975 = vmatpush1.xpose.msra.mxu0 %v452
        %976 = vmatprep.subr.mxu0 %v461
        %977 = vmatpush1.xpose.msra.mxu0 %v460
        %978 = vmatprep.subr.mxu0 %v469
        %979 = vmatpush1.xpose.msra.mxu0 %v468
        %980 = vmatprep.subr.mxu0 %v477
        %981 = vmatpush1.xpose.msra.mxu0 %v476
        %982 = vmatprep.subr.mxu0 %v485
        %983 = vmatpush1.xpose.msra.mxu0 %v484
        %984 = vmatprep.subr.mxu0 %v493
        %985 = vmatpush1.xpose.msra.mxu0 %v492
        %986 = vmatprep.subr.mxu0 %v501
        %987 = vmatpush1.xpose.msra.mxu0 %v500
        %988 = vmatprep.subr.mxu0 %v509
        %989 = vmatpush1.xpose.msra.mxu0 %v508
        %990 = vmatprep.subr.mxu0 %v517
        %991 = vmatpush1.xpose.msra.mxu0 %v516
        %992 = vmatprep.subr.mxu0 0.0
        %993 = vmatpush1.xpose.msra.mxu0 0.0
        %994 = vmatprep.subr.mxu0 0.0
        %995 = vmatpush1.xpose.msra.mxu0 0.0
        %996 = vmatprep.subr.mxu0 0.0
        %997 = vmatpush1.xpose.msra.mxu0 0.0
        %998 = vmatprep.subr.mxu0 0.0
        %999 = vmatpush1.xpose.msra.mxu0 0.0
        %1000 = vmatprep.subr.mxu0 0.0
        %1001 = vmatpush1.xpose.msra.mxu0 0.0
        %1002 = vmatprep.subr.mxu0 0.0
        %1003 = vmatpush1.xpose.msra.mxu0 0.0
        %1004 = vmatprep.subr.mxu0 0.0
        %1005 = vmatpush1.xpose.msra.mxu0 0.0
        %1006 = vmatprep.subr.mxu0 0.0
        %1007 = vmatpush1.xpose.msra.mxu0 0.0
        %1008 = vmatprep.subr.mxu0 0.0
        %1009 = vmatpush1.xpose.msra.mxu0 0.0
        %1010 = vmatprep.subr.mxu0 0.0
        %1011 = vmatpush1.xpose.msra.mxu0 0.0
        %1012 = vmatprep.subr.mxu0 0.0
        %1013 = vmatpush1.xpose.msra.mxu0 0.0
        %1014 = vmatprep.subr.mxu0 0.0
        %1015 = vmatpush1.xpose.msra.mxu0 0.0
        %1016 = vmatprep.subr.mxu0 0.0
        %1017 = vmatpush1.xpose.msra.mxu0 0.0
        %1018 = vmatprep.subr.mxu0 0.0
        %1019 = vmatpush1.xpose.msra.mxu0 0.0
        %1020 = vmatprep.subr.mxu0 0.0
        %1021 = vmatpush1.xpose.msra.mxu0 0.0
        %1022 = vmatprep.subr.mxu0 0.0
        %1023 = vmatpush1.xpose.msra.mxu0 0.0
        %1024 = vmatprep.mubr.f32.mxu0 %v269
        %1025 = vmatmul.mubr.f32.gmra.mrb[0].mxu0 %v268
        %v1026 = vpop.f32.mrb[0].mxu0
        %v1027 = vadd.f32 %v882, %v1026
        %v1028 = vpop.f32.mrb[0].mxu0
        %1029 = vmatprep.mubr.f32.mxu0 %v277
        %1030 = vmatmul.mubr.f32.gmra.mrb[0].mxu0 %v276
        %v1031 = vpop.f32.mrb[0].mxu0
        %v1032 = vadd.f32 %v887, %v1031
        %v1033 = vpop.f32.mrb[0].mxu0
        %1034 = vmatprep.mubr.f32.mxu0 %v285
        %1035 = vmatmul.mubr.f32.gmra.mrb[0].mxu0 %v284
        %v1036 = vpop.f32.mrb[0].mxu0
        %v1037 = vadd.f32 %v892, %v1036
        %v1038 = vpop.f32.mrb[0].mxu0
        %1039 = vmatprep.mubr.f32.mxu0 %v293
        %1040 = vmatmul.mubr.f32.gmra.mrb[0].mxu0 %v292
        %v1041 = vpop.f32.mrb[0].mxu0
        %v1042 = vadd.f32 %v897, %v1041
        %v1043 = vpop.f32.mrb[0].mxu0
        %1044 = vmatprep.mubr.f32.mxu0 %v301
        %1045 = vmatmul.mubr.f32.gmra.mrb[0].mxu0 %v300
        %v1046 = vpop.f32.mrb[0].mxu0
        %v1047 = vadd.f32 %v902, %v1046
        %v1048 = vpop.f32.mrb[0].mxu0
        %1049 = vmatprep.mubr.f32.mxu0 %v309
        %1050 = vmatmul.mubr.f32.gmra.mrb[0].mxu0 %v308
        %v1051 = vpop.f32.mrb[0].mxu0
        %v1052 = vadd.f32 %v907, %v1051
        %v1053 = vpop.f32.mrb[0].mxu0
        %1054 = vmatprep.mubr.f32.mxu0 %v317
        %1055 = vmatmul.mubr.f32.gmra.mrb[0].mxu0 %v316
        %v1056 = vpop.f32.mrb[0].mxu0
        %v1057 = vadd.f32 %v912, %v1056
        %v1058 = vpop.f32.mrb[0].mxu0
        %1059 = vmatprep.mubr.f32.mxu0 %v325
        %1060 = vmatmul.mubr.f32.gmra.mrb[0].mxu0 %v324
        %v1061 = vpop.f32.mrb[0].mxu0
        %v1062 = vadd.f32 %v917, %v1061
        %v1063 = vpop.f32.mrb[0].mxu0
        %1064 = vmatprep.mubr.f32.mxu0 %v333
        %1065 = vmatmul.mubr.f32.gmra.mrb[0].mxu0 %v332
        %v1066 = vpop.f32.mrb[0].mxu0
        %v1067 = vadd.f32 %v922, %v1066
        %v1068 = vpop.f32.mrb[0].mxu0
        %1069 = vmatprep.mubr.f32.mxu0 %v341
        %1070 = vmatmul.mubr.f32.gmra.mrb[0].mxu0 %v340
        %v1071 = vpop.f32.mrb[0].mxu0
        %v1072 = vadd.f32 %v927, %v1071
        %v1073 = vpop.f32.mrb[0].mxu0
        %1074 = vmatprep.mubr.f32.mxu0 %v349
        %1075 = vmatmul.mubr.f32.gmra.mrb[0].mxu0 %v348
        %v1076 = vpop.f32.mrb[0].mxu0
        %v1077 = vadd.f32 %v932, %v1076
        %v1078 = vpop.f32.mrb[0].mxu0
        %1079 = vmatprep.mubr.f32.mxu0 %v357
        %1080 = vmatmul.mubr.f32.gmra.mrb[0].mxu0 %v356
        %v1081 = vpop.f32.mrb[0].mxu0
        %v1082 = vadd.f32 %v937, %v1081
        %v1083 = vpop.f32.mrb[0].mxu0
        %1084 = vmatprep.mubr.f32.mxu0 %v365
        %1085 = vmatmul.mubr.f32.gmra.mrb[0].mxu0 %v364
        %v1086 = vpop.f32.mrb[0].mxu0
        %v1087 = vadd.f32 %v942, %v1086
        %v1088 = vpop.f32.mrb[0].mxu0
        %1089 = vmatprep.mubr.f32.mxu0 %v373
        %1090 = vmatmul.mubr.f32.gmra.mrb[0].mxu0 %v372
        %v1091 = vpop.f32.mrb[0].mxu0
        %v1092 = vadd.f32 %v947, %v1091
        %v1093 = vpop.f32.mrb[0].mxu0
        %1094 = vmatprep.mubr.f32.mxu0 %v381
        %1095 = vmatmul.mubr.f32.gmra.mrb[0].mxu0 %v380
        %v1096 = vpop.f32.mrb[0].mxu0
        %v1097 = vadd.f32 %v952, %v1096
        %v1098 = vpop.f32.mrb[0].mxu0
        %1099 = vmatprep.mubr.f32.mxu0 %v389
        %1100 = vmatmul.mubr.f32.gmra.mrb[0].mxu0 %v388
        %v1101 = vpop.f32.mrb[0].mxu0
        %v1102 = vadd.f32 %v957, %v1101
        %v1103 = vpop.f32.mrb[0].mxu0
        %1104 = vdwg.mxu0
        %v1105 = vmax.f32 %v1027, 0.0
        %v1106 = vmax.f32 %v1032, 0.0
        %v1107 = vmax.f32 %v1037, 0.0
        %v1108 = vmax.f32 %v1042, 0.0
        %v1109 = vmax.f32 %v1047, 0.0
        %v1110 = vmax.f32 %v1052, 0.0
        %v1111 = vmax.f32 %v1057, 0.0
        %v1112 = vmax.f32 %v1062, 0.0
        %v1113 = vmax.f32 %v1067, 0.0
        %v1114 = vmax.f32 %v1072, 0.0
        %v1115 = vmax.f32 %v1077, 0.0
        %v1116 = vmax.f32 %v1082, 0.0
        %v1117 = vmax.f32 %v1087, 0.0
        %v1118 = vmax.f32 %v1092, 0.0
        %v1119 = vmax.f32 %v1097, 0.0
        %v1120 = vmax.f32 %v1102, 0.0
        %1121 = vst [vmem:[%s258] sm:$0xff] %v1105
        %1122 = vst [vmem:[%s258 + $0x8] sm:$0xff] %v1106
        %1123 = vst [vmem:[%s258 + $0x10] sm:$0xff] %v1107
        %1124 = vst [vmem:[%s258 + $0x18] sm:$0xff] %v1108
        %1125 = vst [vmem:[%s258 + $0x20] sm:$0xff] %v1109
        %1126 = vst [vmem:[%s258 + $0x28] sm:$0xff] %v1110
        %1127 = vst [vmem:[%s258 + $0x30] sm:$0xff] %v1111
        %1128 = vst [vmem:[%s258 + $0x38] sm:$0xff] %v1112
        %1129 = vst [vmem:[%s258 + $0x40] sm:$0xff] %v1113
        %1130 = vst [vmem:[%s258 + $0x48] sm:$0xff] %v1114
        %1131 = vst [vmem:[%s258 + $0x50] sm:$0xff] %v1115
        %1132 = vst [vmem:[%s258 + $0x58] sm:$0xff] %v1116
        %1133 = vst [vmem:[%s258 + $0x60] sm:$0xff] %v1117
        %1134 = vst [vmem:[%s258 + $0x68] sm:$0xff] %v1118
        %1135 = vst [vmem:[%s258 + $0x70] sm:$0xff] %v1119
        %1136 = vst [vmem:[%s258 + $0x78] sm:$0xff] %v1120
        %s1137 = sand.u32 %s121, 1
        %s1138 = scalar_lea.sflag [#allocation4], %s1137
        %s1139 = sand.u32 %s121, 1
        %s1140 = smul.addr %s1139, 128
        %s1141 = scalar_lea.vmem [#allocation8], %s1140
        // Predicated region
        $region45: #{tpu_custom_call.1} parent=31 // pred_check
          %p1142 = pneg %p131
        $region46: #{tpu_custom_call.1} parent=31 // pred_check_branch
          %1144 = sbr.rel (%p1142) target = $region48
        $region47: #{tpu_custom_call.1} parent=31 // pred_region
          %s1145 = smul.u32 16, %s25
          %s1147 = ssub.s32 2048, 2048
          %1148 = vsyncadd %s1138, %s1147
          %s1149 = smul.addr %s1145, 4
          %s1150 = sadd.s32 %s26, %s1149
          %s1151 = smul.addr %s1150, 128
          %s1152 = scalar_lea.hbm %s3, %s1151
          %s1153 = sshll.u32 %s1141, 4
          %s1154 = int_to_ptr.vmem [resolvable:$true] %s1153
          %1159 = dma.vmem_to_hbm [thread:$0]  %s1154, 2048, %s1152, %s1138, 128, 512, 8
        $region48: #{tpu_custom_call.1} parent=31 // pred_fallthru
          _
      $region32: #{tpu_custom_call.1} parent=5 // pred_fallthru
        _
      %p1160 = scmp.le.s32.totalorder 2, %s16
      // Predicated region
      $region49: #{tpu_custom_call.1} parent=5 // pred_check
        %p1161 = pneg %p1160
      $region50: #{tpu_custom_call.1} parent=5 // pred_check_branch
        %1163 = sbr.rel (%p1161) target = $region52
      $region51: #{tpu_custom_call.1} parent=5 // pred_region
        %s1164 = ssub.s32 %s16, 2
        // Predicated region
        $region53: #{tpu_custom_call.1} parent=51 // pred_check
          %p1165 = pneg %p137
        $region54: #{tpu_custom_call.1} parent=51 // pred_check_branch
          %1167 = sbr.rel (%p1165) target = $region56
        $region55: #{tpu_custom_call.1} parent=51 // pred_region
          %s1168 = sand.u32 %s122, 1
          %s1169 = scalar_lea.sflag [#allocation4], %s1168
          %s1170 = sand.u32 %s122, 1
          %s1171 = smul.addr %s1170, 128
          %s1172 = scalar_lea.vmem [#allocation8], %s1171
          %1173 = dma.done %s1169, 2048
        $region56: #{tpu_custom_call.1} parent=51 // pred_fallthru
          _
      $region52: #{tpu_custom_call.1} parent=5 // pred_fallthru
        _
    $region6: #{tpu_custom_call.1} parent=1 // loop_footer
      %s20 = sadd.s32 1, %s16
    $region7: #{tpu_custom_call.1} parent=1 // loop_footer_branch
      %15 = sbr.rel target = $region3
    $region8: #{tpu_custom_call.1} parent=1 // loop_exit
      _
    %1174 = vsyncpa [#allocation3], 1
    %s1175 = scalar_lea.sflag [#allocation3], 1
    %1176 = vsyncpa %s1175, 1
    %1177 = vsyncpa [#allocation6], 1
    %s1178 = scalar_lea.sflag [#allocation6], 1
    %1179 = vsyncpa %s1178, 1
    %1180 = vsyncpa [#allocation4], 1
    %s1181 = scalar_lea.sflag [#allocation4], 1
    %1182 = vsyncpa %s1181, 1

</llo_original>
